<compile_context>
chip_gen: v7x
topology: tpu7x:2x2x1
jax: 0.10.0
libtpu: 0.0.40
codegen_flags: <defaults>
</compile_context>

<pallas_src>
import jax
import jax.numpy as jnp
from jax import lax
from jax.experimental import pallas as pl
from jax.experimental.pallas import tpu as pltpu

_LANE = 128
_VMEM_BUDGET = 40 << 20        # tile-selection budget; safe under v7x's 64 MiB physical VMEM
_VMEM_LIMIT_CAP = 48 << 20


def bihalf_kernel(u_ref, b_ref):
    """One feature tile: per-column lower median over the batch, then binarize."""
    n, td = u_ref.shape
    k = (n - 1) // 2                        # lower-median order-statistic index
    thresh = jnp.float32(k + 1)
    pos_inf = jnp.array(jnp.inf, dtype=u_ref.dtype)

    blk = min(8, n)                         # i-block: one f32 sublane vreg per lane column
    num_blocks = pl.cdiv(n, blk)

    def count_block(bi, med):
        # Clamp so the last (possibly ragged) block stays in range; overlapping rows
        # recompute identical candidates, which is harmless for the running min.
        start = jnp.minimum(bi * blk, n - blk)
        ub = u_ref[pl.ds(start, blk), :]                    # (blk, td), native dtype

        def count_row(j, cnt):
            row = u_ref[pl.ds(j, 1), :]                     # (1, td)
            return cnt + (row <= ub).astype(jnp.float32)

        cnt = lax.fori_loop(0, n, count_row,
                            jnp.zeros((blk, td), jnp.float32),
                            unroll=min(8, n))
        # Lower median = smallest value whose <=-count reaches k+1.
        # +inf sentinel is safe even if a column itself contains +inf.
        cand = jnp.where(cnt >= thresh, ub, pos_inf)
        return jnp.minimum(med, jnp.min(cand, axis=0, keepdims=True))

    med = lax.fori_loop(0, num_blocks, count_block,
                        jnp.full((1, td), pos_inf, dtype=u_ref.dtype))

    one = jnp.float32(1.0)
    b_ref[...] = jnp.where(u_ref[...] > med, one, -one).astype(b_ref.dtype)


def _vmem_per_lane_bytes(n, in_itemsize, out_itemsize=4):
    # Double-buffered input/output pipeline blocks + in-kernel live values
    # (full-tile load for the binarize pass, f32 result, small count/median blocks).
    return n * (3 * in_itemsize + 3 * out_itemsize) + 16 * out_itemsize


def _choose_tile_d(n, d, in_itemsize):
    """Largest 128-multiple tile dividing d that fits the VMEM budget."""
    per_lane = _vmem_per_lane_bytes(n, in_itemsize)
    max_td = max(_LANE, (_VMEM_BUDGET // per_lane) // _LANE * _LANE)
    cands = [td for td in range(_LANE, d + 1, _LANE) if d % td == 0 and td <= max_td]
    return max(cands) if cands else _LANE


def bihalf_layer(x, training=True, tile_d=None):
    """JAX/Pallas equivalent of BiHalfLayer.forward (forward pass only)."""
    if not training:
        return x                             # eval mode: identity (matches the PyTorch module)

    n, d = x.shape
    in_it = x.dtype.itemsize
    per_lane = _vmem_per_lane_bytes(n, in_it)

    if d % _LANE == 0:
        d_run, xp = d, x
        if tile_d is None:
            tile_d = _choose_tile_d(n, d, in_it)
    elif per_lane * d <= _VMEM_BUDGET:
        # Ragged/small feature dim: a single full-D block (block dim == array dim is
        # legal) avoids wrapper-side pad + slice HBM passes; masked stores on one block.
        d_run, xp, tile_d = d, x, d
    else:
        d_run = pl.cdiv(d, _LANE) * _LANE
        xp = jnp.pad(x, ((0, 0), (0, d_run - d)))
        if tile_d is None:
            tile_d = _choose_tile_d(n, d_run, in_it)

    assert d_run % tile_d == 0
    grid = (d_run // tile_d,)
    vmem_limit = int(min(max(per_lane * tile_d + (2 << 20), 16 << 20), _VMEM_LIMIT_CAP))

    out = pl.pallas_call(
        bihalf_kernel,
        out_shape=jax.ShapeDtypeStruct((n, d_run), jnp.float32),
        grid_spec=pltpu.PrefetchScalarGridSpec(
            num_scalar_prefetch=0,
            grid=grid,
            in_specs=[pl.BlockSpec((n, tile_d), lambda j: (0, j))],
            out_specs=pl.BlockSpec((n, tile_d), lambda j: (0, j)),
        ),
        compiler_params=pltpu.CompilerParams(
            dimension_semantics=("parallel",),
            vmem_limit_bytes=vmem_limit,
        ),
    )(xp)

    return out if d_run == d else out[:, :d]


def _reference(x):
    """Pure-JAX reference with torch.median (lower median) semantics."""
    n = x.shape[0]
    k = (n - 1) // 2
    med = jnp.sort(x, axis=0)[k]             # (D,), lower median per column
    return jnp.where(x > med[None, :], 1.0, -1.0).astype(jnp.float32)


if __name__ == "__main__":
    key = jax.random.PRNGKey(0)
    k1, k2, k3 = jax.random.split(key, 3)

    # Case 1: small f32 hash codes; ragged feature dim -> single full-D block, no pad.
    x1 = jax.random.normal(k1, (8, 32), dtype=jnp.float32)
    out1 = jax.block_until_ready(bihalf_layer(x1, training=True))
    ref1 = _reference(x1)
    assert out1.shape == ref1.shape and out1.dtype == jnp.float32
    assert bool(jnp.all(out1 == ref1))

    # Case 2: bf16 input (no wrapper cast), lane-multiple feature dim (tiled path).
    x2 = jax.random.normal(k2, (16, 256), dtype=jnp.bfloat16)
    out2 = jax.block_until_ready(bihalf_layer(x2, training=True))
    ref2 = _reference(x2)
    assert out2.shape == ref2.shape and out2.dtype == jnp.float32
    assert bool(jnp.all(out2 == ref2))

    # Case 3: odd batch size (true middle element), batch not a sublane multiple.
    x3 = jax.random.normal(k3, (7, 128), dtype=jnp.float32)
    out3 = jax.block_until_ready(bihalf_layer(x3, training=True))
    ref3 = _reference(x3)
    assert bool(jnp.all(out3 == ref3))

    # Eval mode is identity (native dtype preserved, as in the PyTorch module).
    out_eval = jax.block_until_ready(bihalf_layer(x1, training=False))
    assert bool(jnp.all(out_eval == x1))

    print("KERNEL_OK")
</pallas_src>

<mosaic_0001>
module attributes {stable_mosaic.version = 11 : i64} {
  func.func @bihalf_kernel(%arg0: i32, %arg1: memref<8x32xf32, #tpu.memory_space<vmem>>, %arg2: memref<8x32xf32, #tpu.memory_space<vmem>>) attributes {dimension_semantics = [#tpu.dimension_semantics<parallel>], iteration_bounds = array<i64: 1>, scalar_prefetch = 0 : i64, scratch_operands = 0 : i64, tpu.core_type = #tpu.core_type<tc>, window_params = [{transform_indices = @transform_0, window_bounds = array<i64: 8, 32>}, {transform_indices = @transform_1, window_bounds = array<i64: 8, 32>}]} {
    %cst = arith.constant 0x7F800000 : f32
    %0 = vector.broadcast %cst : f32 to vector<1x32xf32>
    %cst_0 = arith.constant 4.000000e+00 : f32
    %cst_1 = arith.constant 0x7F800000 : f32
    %c0_i32 = arith.constant 0 : i32
    %c8_i32 = arith.constant 8 : i32
    %1 = arith.muli %c0_i32, %c8_i32 : i32
    %c0_i32_2 = arith.constant 0 : i32
    %2 = arith.minsi %1, %c0_i32_2 : i32
    %3 = arith.index_cast %2 : i32 to index
    %c0 = arith.constant 0 : index
    %4 = vector.load %arg1[%3, %c0] : memref<8x32xf32, #tpu.memory_space<vmem>>, vector<8x32xf32>
    %cst_3 = arith.constant 0.000000e+00 : f32
    %5 = vector.broadcast %cst_3 : f32 to vector<8x32xf32>
    %c0_i32_4 = arith.constant 0 : i32
    %6 = arith.index_cast %c0_i32_4 : i32 to index
    %c0_5 = arith.constant 0 : index
    %7 = vector.load %arg1[%6, %c0_5] : memref<8x32xf32, #tpu.memory_space<vmem>>, vector<1x32xf32>
    %8 = vector.broadcast %7 : vector<1x32xf32> to vector<8x32xf32>
    %9 = arith.cmpf ole, %8, %4 : vector<8x32xf32>
    %10 = arith.extui %9 : vector<8x32xi1> to vector<8x32xi32>
    %11 = arith.sitofp %10 : vector<8x32xi32> to vector<8x32xf32>
    %12 = arith.addf %5, %11 : vector<8x32xf32>
    %c1_i32 = arith.constant 1 : i32
    %13 = arith.index_cast %c1_i32 : i32 to index
    %c0_6 = arith.constant 0 : index
    %14 = vector.load %arg1[%13, %c0_6] : memref<8x32xf32, #tpu.memory_space<vmem>>, vector<1x32xf32>
    %15 = vector.broadcast %14 : vector<1x32xf32> to vector<8x32xf32>
    %16 = arith.cmpf ole, %15, %4 : vector<8x32xf32>
    %17 = arith.extui %16 : vector<8x32xi1> to vector<8x32xi32>
    %18 = arith.sitofp %17 : vector<8x32xi32> to vector<8x32xf32>
    %19 = arith.addf %12, %18 : vector<8x32xf32>
    %c2_i32 = arith.constant 2 : i32
    %20 = arith.index_cast %c2_i32 : i32 to index
    %c0_7 = arith.constant 0 : index
    %21 = vector.load %arg1[%20, %c0_7] : memref<8x32xf32, #tpu.memory_space<vmem>>, vector<1x32xf32>
    %22 = vector.broadcast %21 : vector<1x32xf32> to vector<8x32xf32>
    %23 = arith.cmpf ole, %22, %4 : vector<8x32xf32>
    %24 = arith.extui %23 : vector<8x32xi1> to vector<8x32xi32>
    %25 = arith.sitofp %24 : vector<8x32xi32> to vector<8x32xf32>
    %26 = arith.addf %19, %25 : vector<8x32xf32>
    %c3_i32 = arith.constant 3 : i32
    %27 = arith.index_cast %c3_i32 : i32 to index
    %c0_8 = arith.constant 0 : index
    %28 = vector.load %arg1[%27, %c0_8] : memref<8x32xf32, #tpu.memory_space<vmem>>, vector<1x32xf32>
    %29 = vector.broadcast %28 : vector<1x32xf32> to vector<8x32xf32>
    %30 = arith.cmpf ole, %29, %4 : vector<8x32xf32>
    %31 = arith.extui %30 : vector<8x32xi1> to vector<8x32xi32>
    %32 = arith.sitofp %31 : vector<8x32xi32> to vector<8x32xf32>
    %33 = arith.addf %26, %32 : vector<8x32xf32>
    %c4_i32 = arith.constant 4 : i32
    %34 = arith.index_cast %c4_i32 : i32 to index
    %c0_9 = arith.constant 0 : index
    %35 = vector.load %arg1[%34, %c0_9] : memref<8x32xf32, #tpu.memory_space<vmem>>, vector<1x32xf32>
    %36 = vector.broadcast %35 : vector<1x32xf32> to vector<8x32xf32>
    %37 = arith.cmpf ole, %36, %4 : vector<8x32xf32>
    %38 = arith.extui %37 : vector<8x32xi1> to vector<8x32xi32>
    %39 = arith.sitofp %38 : vector<8x32xi32> to vector<8x32xf32>
    %40 = arith.addf %33, %39 : vector<8x32xf32>
    %c5_i32 = arith.constant 5 : i32
    %41 = arith.index_cast %c5_i32 : i32 to index
    %c0_10 = arith.constant 0 : index
    %42 = vector.load %arg1[%41, %c0_10] : memref<8x32xf32, #tpu.memory_space<vmem>>, vector<1x32xf32>
    %43 = vector.broadcast %42 : vector<1x32xf32> to vector<8x32xf32>
    %44 = arith.cmpf ole, %43, %4 : vector<8x32xf32>
    %45 = arith.extui %44 : vector<8x32xi1> to vector<8x32xi32>
    %46 = arith.sitofp %45 : vector<8x32xi32> to vector<8x32xf32>
    %47 = arith.addf %40, %46 : vector<8x32xf32>
    %c6_i32 = arith.constant 6 : i32
    %48 = arith.index_cast %c6_i32 : i32 to index
    %c0_11 = arith.constant 0 : index
    %49 = vector.load %arg1[%48, %c0_11] : memref<8x32xf32, #tpu.memory_space<vmem>>, vector<1x32xf32>
    %50 = vector.broadcast %49 : vector<1x32xf32> to vector<8x32xf32>
    %51 = arith.cmpf ole, %50, %4 : vector<8x32xf32>
    %52 = arith.extui %51 : vector<8x32xi1> to vector<8x32xi32>
    %53 = arith.sitofp %52 : vector<8x32xi32> to vector<8x32xf32>
    %54 = arith.addf %47, %53 : vector<8x32xf32>
    %c7_i32 = arith.constant 7 : i32
    %55 = arith.index_cast %c7_i32 : i32 to index
    %c0_12 = arith.constant 0 : index
    %56 = vector.load %arg1[%55, %c0_12] : memref<8x32xf32, #tpu.memory_space<vmem>>, vector<1x32xf32>
    %57 = vector.broadcast %56 : vector<1x32xf32> to vector<8x32xf32>
    %58 = arith.cmpf ole, %57, %4 : vector<8x32xf32>
    %59 = arith.extui %58 : vector<8x32xi1> to vector<8x32xi32>
    %60 = arith.sitofp %59 : vector<8x32xi32> to vector<8x32xf32>
    %61 = arith.addf %54, %60 : vector<8x32xf32>
    %c8_i32_13 = arith.constant 8 : i32
    %62 = vector.broadcast %cst_0 : f32 to vector<8x32xf32>
    %63 = arith.cmpf oge, %61, %62 : vector<8x32xf32>
    %64 = vector.broadcast %cst_1 : f32 to vector<8x32xf32>
    %65 = arith.select %63, %4, %64 : vector<8x32xi1>, vector<8x32xf32>
    %cst_14 = arith.constant dense<0x7F800000> : vector<32xf32>
    %66 = vector.multi_reduction <minimumf>, %65, %cst_14 [0] : vector<8x32xf32> to vector<32xf32>
    %67 = vector.shape_cast %66 : vector<32xf32> to vector<1x32xf32>
    %68 = arith.minimumf %0, %67 : vector<1x32xf32>
    %c1_i32_15 = arith.constant 1 : i32
    %c0_16 = arith.constant 0 : index
    %c0_17 = arith.constant 0 : index
    %69 = vector.load %arg1[%c0_16, %c0_17] : memref<8x32xf32, #tpu.memory_space<vmem>>, vector<8x32xf32>
    %70 = vector.broadcast %68 : vector<1x32xf32> to vector<8x32xf32>
    %71 = arith.cmpf ogt, %69, %70 : vector<8x32xf32>
    %cst_18 = arith.constant 0.000000e+00 : f32
    %cst_19 = arith.constant 1.000000e+00 : f32
    %72 = arith.subf %cst_18, %cst_19 : f32
    %cst_20 = arith.constant 1.000000e+00 : f32
    %73 = vector.broadcast %cst_20 : f32 to vector<8x32xf32>
    %74 = vector.broadcast %72 : f32 to vector<8x32xf32>
    %75 = arith.select %71, %73, %74 : vector<8x32xi1>, vector<8x32xf32>
    %c0_21 = arith.constant 0 : index
    %c0_22 = arith.constant 0 : index
    %76 = vector.load %arg2[%c0_21, %c0_22] : memref<8x32xf32, #tpu.memory_space<vmem>>, vector<8x32xf32>
    tpu.vector_store %arg2[%c0_21, %c0_22], %75 {strides = array<i32>} : memref<8x32xf32, #tpu.memory_space<vmem>>, vector<8x32xf32>,
    return
  }
  func.func @transform_0(%arg0: i32) -> (i32, i32) {
    %c0_i32 = arith.constant 0 : i32
    %c0_i32_0 = arith.constant 0 : i32
    return %c0_i32, %arg0 : i32, i32
  }
  func.func @transform_1(%arg0: i32) -> (i32, i32) {
    %c0_i32 = arith.constant 0 : i32
    %c0_i32_0 = arith.constant 0 : i32
    return %c0_i32, %arg0 : i32, i32
  }
}

</mosaic_0001>

<llo_original>
// kernel: tpu_custom_call.1
$region0: #{tpu_custom_call.1}
  #allocation0 [shape = 'u32[]', space=smem, size = 0x4, offset = 0x4, fixed_abs, tag = 'smem constant byte address 0x4 - core index']
  #allocation1 [shape = 'u32[144,128]{1,0:T(1,128)}', space=vmem, size = 0x12000, scoped, tag = 'internal scratch']
  %s0 = inlined_call_operand.hbm [shape: f32[8,32], index: 0, kind: input, shape index: {}]
  %s1 = inlined_call_operand.hbm [shape: f32[8,32], index: 1, kind: output, shape index: {}]
  %s2 = sld [smem:[#allocation0]]
  $region18: #{tpu_custom_call.1} parent=0
    _
  %s4 = ssub.s32 1, %s2
  %s5 = scalar_select 0, %s4, %s2
  $region1: #{tpu_custom_call.1} parent=0
    #allocation2 [shape = 'u8[4096]{0}', space=vmem, size = 0x1000, scoped, tag = 'input window, operand 0, single buffered']
    #allocation3 [shape = 's32[1]{0}', space=sflag, size = 0x4, scoped, tag = 'scoped memory for tpu_custom_call.1']
    #allocation4 [shape = 's32[1]{0}', space=sflag, size = 0x4, scoped, tag = 'scoped memory for tpu_custom_call.1']
    #allocation5 [shape = 'u8[4096]{0}', space=vmem, size = 0x1000, scoped, tag = 'output window, operand 0, single buffered']
    %6 = vsyncpa [#allocation3], 0
    %7 = vsyncpa [#allocation4], 0
    // Predicated region
    $region2: #{tpu_custom_call.1} parent=1 // pred_check
      _
    $region3: #{tpu_custom_call.1} parent=1 // pred_check_branch
      %9 = sbr.rel (0) target = $region5
    $region4: #{tpu_custom_call.1} parent=1 // pred_region
      %s11 = ssub.s32 128, 128
      %12 = vsyncadd [#allocation3], %s11
      %s14 = sshll.u32 [#allocation2], 4
      %s15 = int_to_ptr.vmem [resolvable:$true] %s14
      %17 = dma.hbm_to_vmem [thread:$0]  %s0, 128, %s15, [#allocation3]
    $region5: #{tpu_custom_call.1} parent=1 // pred_fallthru
      _
    // Predicated region
    $region6: #{tpu_custom_call.1} parent=1 // pred_check
      _
    $region7: #{tpu_custom_call.1} parent=1 // pred_check_branch
      %19 = sbr.rel (0) target = $region9
    $region8: #{tpu_custom_call.1} parent=1 // pred_region
      %20 = dma.done [#allocation3], 128
    $region9: #{tpu_custom_call.1} parent=1 // pred_fallthru
      _
    %v21 = vld [vmem:[#allocation2] sm:$0xff]
    %v22 = vld [vmem:[#allocation2] sm:$0x1]
    %v23 = vlaneseq
    %v24 = vshrl.u32 %v23, 7
    %v25 = vsub.s32 0, %v24
    %v26 = vrot.slane %v22, %v25
    %vm27 = vcmp.le.f32.partialorder %v26, %v21
    %v28 = vsel %vm27, 1, 0
    %v29 = vcvt.s32.f32 %v28
    %v30 = vadd.f32 %v29, 0.0
    %v31 = vld [vmem:[#allocation2 + $0x1] sm:$0x1]
    %v32 = vlaneseq
    %v33 = vshrl.u32 %v32, 7
    %v34 = vsub.s32 0, %v33
    %v35 = vrot.slane %v31, %v34
    %vm36 = vcmp.le.f32.partialorder %v35, %v21
    %v37 = vsel %vm36, 1, 0
    %v38 = vcvt.s32.f32 %v37
    %v39 = vadd.f32 %v30, %v38
    %v40 = vld [vmem:[#allocation2 + $0x2] sm:$0x1]
    %v41 = vlaneseq
    %v42 = vshrl.u32 %v41, 7
    %v43 = vsub.s32 0, %v42
    %v44 = vrot.slane %v40, %v43
    %vm45 = vcmp.le.f32.partialorder %v44, %v21
    %v46 = vsel %vm45, 1, 0
    %v47 = vcvt.s32.f32 %v46
    %v48 = vadd.f32 %v39, %v47
    %v49 = vld [vmem:[#allocation2 + $0x3] sm:$0x1]
    %v50 = vlaneseq
    %v51 = vshrl.u32 %v50, 7
    %v52 = vsub.s32 0, %v51
    %v53 = vrot.slane %v49, %v52
    %vm54 = vcmp.le.f32.partialorder %v53, %v21
    %v55 = vsel %vm54, 1, 0
    %v56 = vcvt.s32.f32 %v55
    %v57 = vadd.f32 %v48, %v56
    %v58 = vld [vmem:[#allocation2 + $0x4] sm:$0x1]
    %v59 = vlaneseq
    %v60 = vshrl.u32 %v59, 7
    %v61 = vsub.s32 0, %v60
    %v62 = vrot.slane %v58, %v61
    %vm63 = vcmp.le.f32.partialorder %v62, %v21
    %v64 = vsel %vm63, 1, 0
    %v65 = vcvt.s32.f32 %v64
    %v66 = vadd.f32 %v57, %v65
    %v67 = vld [vmem:[#allocation2 + $0x5] sm:$0x1]
    %v68 = vlaneseq
    %v69 = vshrl.u32 %v68, 7
    %v70 = vsub.s32 0, %v69
    %v71 = vrot.slane %v67, %v70
    %vm72 = vcmp.le.f32.partialorder %v71, %v21
    %v73 = vsel %vm72, 1, 0
    %v74 = vcvt.s32.f32 %v73
    %v75 = vadd.f32 %v66, %v74
    %v76 = vld [vmem:[#allocation2 + $0x6] sm:$0x1]
    %v77 = vlaneseq
    %v78 = vshrl.u32 %v77, 7
    %v79 = vsub.s32 0, %v78
    %v80 = vrot.slane %v76, %v79
    %vm81 = vcmp.le.f32.partialorder %v80, %v21
    %v82 = vsel %vm81, 1, 0
    %v83 = vcvt.s32.f32 %v82
    %v84 = vadd.f32 %v75, %v83
    %v85 = vld [vmem:[#allocation2 + $0x7] sm:$0x1]
    %v86 = vlaneseq
    %v87 = vshrl.u32 %v86, 7
    %v88 = vsub.s32 0, %v87
    %v89 = vrot.slane %v85, %v88
    %vm90 = vcmp.le.f32.partialorder %v89, %v21
    %v91 = vsel %vm90, 1, 0
    %v92 = vcvt.s32.f32 %v91
    %v93 = vadd.f32 %v84, %v92
    %vm94 = vcmp.ge.f32.partialorder %v93, 4.0
    %v95 = vsel %vm94, %v21, inf
    %vm96 = vcmask 261120
    %v97 = vsel %vm96, %v95, inf
    %v98 = vrot.slane %v97, 4
    %v99 = vmin.f32 %v97, %v98
    %v100 = vrot.slane %v99, 2
    %v101 = vmin.f32 %v99, %v100
    %v102 = vrot.slane %v101, 1
    %v103 = vmin.f32 %v101, %v102
    %vm104 = vcmp.gt.f32.partialorder %v21, %v103
    %v105 = vsel %vm104, 1.0, -1.0
    %106 = vst.msk [vmem:[#allocation5] sm:$0xff] %vm96, %v105
    // Predicated region
    $region10: #{tpu_custom_call.1} parent=1 // pred_check
      _
    $region11: #{tpu_custom_call.1} parent=1 // pred_check_branch
      %108 = sbr.rel (0) target = $region13
    $region12: #{tpu_custom_call.1} parent=1 // pred_region
      %s110 = ssub.s32 128, 128
      %111 = vsyncadd [#allocation4], %s110
      %s113 = sshll.u32 [#allocation5], 4
      %s114 = int_to_ptr.vmem [resolvable:$true] %s113
      %116 = dma.vmem_to_hbm [thread:$0]  %s114, 128, %s1, [#allocation4]
    $region13: #{tpu_custom_call.1} parent=1 // pred_fallthru
      _
    // Predicated region
    $region14: #{tpu_custom_call.1} parent=1 // pred_check
      _
    $region15: #{tpu_custom_call.1} parent=1 // pred_check_branch
      %118 = sbr.rel (0) target = $region17
    $region16: #{tpu_custom_call.1} parent=1 // pred_region
      %119 = dma.done [#allocation4], 128
    $region17: #{tpu_custom_call.1} parent=1 // pred_fallthru
      _
    %120 = vsyncpa [#allocation3], 1
    %121 = vsyncpa [#allocation4], 1

</llo_original>
